<compile_context>
chip_gen: v5e
topology: v5e:2x2
jax: 0.10.0
libtpu: 0.0.40
codegen_flags: <defaults>
</compile_context>

<pallas_src>
import functools
import math
from typing import NamedTuple

import jax
import jax.numpy as jnp
from jax.experimental import pallas as pl
from jax.experimental.pallas import tpu as pltpu


def _round_up(x, m):
    return (x + m - 1) // m * m


class PreparedLinearParams(NamedTuple):
    wT: jax.Array    # (Kp, Np) pre-transposed, pre-padded, pre-cast weight
    bias: jax.Array  # (1, Np)  float32, pre-padded
    n: int           # class_count
    k: int           # latent_width
    tn: int
    tk: int


def prepare_rep_quality_params(weight, bias, *, compute_dtype=jnp.bfloat16,
                               tn=None, tk=None):
    """One-time weight prep. Do this ONCE next to the params (outside the
    jitted hot path) so per-call weight HBM traffic is exactly one bf16 read.

    weight: (class_count, latent_width)  float32 (PyTorch nn.Linear layout)
    bias:   (class_count,)               float32
    """
    N, K = weight.shape
    assert bias.shape == (N,)
    if tn is None:
        tn = min(512, _round_up(N, 128))
    if tk is None:
        tk = min(1024, _round_up(K, 128))
    Np, Kp = _round_up(N, tn), _round_up(K, tk)
    # (K, N) layout: kernel does a plain (tm,tk) x (tk,tn) MXU contraction,
    # no per-tile weight transpose.
    wT = jnp.pad(weight.T, ((0, Kp - K), (0, Np - N))).astype(compute_dtype)
    b = jnp.pad(bias, (0, Np - N)).astype(jnp.float32).reshape(1, Np)
    return PreparedLinearParams(wT=wT, bias=b, n=N, k=K, tn=tn, tk=tk)


def _linear_kernel(x_ref, w_ref, b_ref, o_ref, *, compute_dtype):
    """One (tm, tn) f32 output tile, accumulated in place over the K axis.

    x_ref: (tm, tk) activations (input dtype; cast in-kernel)
    w_ref: (tk, tn) pre-transposed weight (compute dtype)
    b_ref: (1, tn)  bias, float32
    o_ref: (tm, tn) float32 output, resident across the K grid axis
    """
    k = pl.program_id(2)

    @pl.when(k == 0)
    def _init():
        o_ref[...] = jnp.broadcast_to(b_ref[...], o_ref.shape)

    # VPU cast hides under DMA/MXU; avoids a wrapper-side HBM pass over a
    # casted copy of x.
    x_tile = x_ref[...].astype(compute_dtype)
    o_ref[...] += jnp.dot(x_tile, w_ref[...],
                          preferred_element_type=jnp.float32)


def rep_quality_linear(x, params: PreparedLinearParams, *, tm=None,
                       vmem_limit_bytes=None):
    """Forward pass of RepQualityLinear:  y = x @ W^T + b.

    x:      (B, latent_width) float32 (or bf16)
    params: PreparedLinearParams from prepare_rep_quality_params
    returns (B, class_count)  float32
    """
    M, K = x.shape
    assert K == params.k
    N = params.n

    # Tiny problems: a single-tile pallas_call only pays fixed per-step cost;
    # a fused XLA dot wins outright (covers the module's shipped small shape).
    if M * N * K < (1 << 20):
        return (jnp.dot(x, params.wT[:K, :N],
                        preferred_element_type=jnp.float32)
                + params.bias[:, :N])

    tn, tk = params.tn, params.tk
    Kp, Np = params.wT.shape

    if tm is None:
        tm = min(512, _round_up(M, 8))
    Mp = _round_up(M, tm)

    # v7x has 2 TensorCores per chip: keep >= 2 points on the parallel axes.
    if Mp // tm == 1 and Np // tn == 1:
        if tn >= 256:
            tn //= 2            # still a multiple of 128 and divides Np
        elif tm >= 16:
            tm //= 2
            Mp = _round_up(M, tm)

    grid = (Mp // tm, Np // tn, Kp // tk)

    xp = x
    if Mp != M or Kp != K:
        # Zero rows/cols contribute nothing; result is sliced back below.
        xp = jnp.pad(x, ((0, Mp - M), (0, Kp - K)))

    out = pl.pallas_call(
        functools.partial(_linear_kernel, compute_dtype=params.wT.dtype),
        out_shape=jax.ShapeDtypeStruct((Mp, Np), jnp.float32),
        grid_spec=pltpu.PrefetchScalarGridSpec(
            num_scalar_prefetch=0,
            grid=grid,
            in_specs=[
                pl.BlockSpec((tm, tk), lambda i, j, k: (i, k)),  # x tile
                pl.BlockSpec((tk, tn), lambda i, j, k: (k, j)),  # W^T tile
                pl.BlockSpec((1, tn), lambda i, j, k: (0, j)),   # bias tile
            ],
            out_specs=pl.BlockSpec((tm, tn), lambda i, j, k: (i, j)),
        ),
        compiler_params=pltpu.CompilerParams(
            dimension_semantics=("parallel", "parallel", "arbitrary"),
            vmem_limit_bytes=vmem_limit_bytes,
        ),
    )(xp, params.wT, params.bias)

    return out[:M, :N]


def init_params(key, latent_width, class_count):
    """Deterministic init matching nn.Linear defaults (uniform +/- 1/sqrt(fan_in))."""
    kw, kb = jax.random.split(key)
    bound = 1.0 / math.sqrt(latent_width)
    weight = jax.random.uniform(
        kw, (class_count, latent_width), jnp.float32, -bound, bound
    )
    bias = jax.random.uniform(kb, (class_count,), jnp.float32, -bound, bound)
    return weight, bias


if __name__ == "__main__":
    key = jax.random.PRNGKey(0)
    kx, kp, krest = jax.random.split(key, 3)

    # Case 1: small module-consistent shape (batch=8, latent=32, classes=16).
    # Below the size threshold -> fused XLA dot fallback path.
    B, LATENT, CLASSES = 8, 32, 16
    x = jax.random.normal(kx, (B, LATENT), jnp.float32)
    weight, bias = init_params(kp, LATENT, CLASSES)
    ref = x @ weight.T + bias

    prep_f32 = prepare_rep_quality_params(weight, bias, compute_dtype=jnp.float32)
    out_f32 = jax.block_until_ready(rep_quality_linear(x, prep_f32))
    assert out_f32.shape == (B, CLASSES)
    assert jnp.allclose(out_f32, ref, atol=1e-5, rtol=1e-5)

    prep_bf16 = prepare_rep_quality_params(weight, bias)
    out_bf16 = jax.block_until_ready(rep_quality_linear(x, prep_bf16))
    assert out_bf16.shape == (B, CLASSES)
    assert jnp.allclose(out_bf16, ref, atol=5e-2, rtol=5e-2)

    # Case 2: exercise the real multi-tile Pallas path (M/N/K tiling, in-place
    # K accumulation into the resident f32 output, N/K padding, in-kernel
    # activation cast) with small explicit tiles -> grid (2, 3, 3).
    B2, LATENT2, CLASSES2 = 16, 384, 272
    kx2, kp2 = jax.random.split(krest)
    x2 = jax.random.normal(kx2, (B2, LATENT2), jnp.float32)
    w2, b2 = init_params(kp2, LATENT2, CLASSES2)
    ref2 = x2 @ w2.T + b2

    prep2_f32 = prepare_rep_quality_params(
        w2, b2, compute_dtype=jnp.float32, tn=128, tk=128)
    out2 = jax.block_until_ready(rep_quality_linear(x2, prep2_f32, tm=8))
    assert out2.shape == (B2, CLASSES2)
    assert jnp.allclose(out2, ref2, atol=1e-4, rtol=1e-4)

    prep2_bf16 = prepare_rep_quality_params(w2, b2, tn=128, tk=128)
    out2_bf = jax.block_until_ready(rep_quality_linear(x2, prep2_bf16, tm=8))
    assert out2_bf.shape == (B2, CLASSES2)
    assert jnp.allclose(out2_bf, ref2, atol=5e-2, rtol=5e-2)

    print("KERNEL_OK")
</pallas_src>

<mosaic_0001>
module attributes {stable_mosaic.version = 11 : i64} {
  func.func @_linear_kernel(%arg0: i32, %arg1: i32, %arg2: i32, %arg3: memref<8x128xf32, #tpu.memory_space<vmem>>, %arg4: memref<128x128xf32, #tpu.memory_space<vmem>>, %arg5: memref<1x128xf32, #tpu.memory_space<vmem>>, %arg6: memref<8x128xf32, #tpu.memory_space<vmem>>) attributes {dimension_semantics = [#tpu.dimension_semantics<parallel>, #tpu.dimension_semantics<parallel>, #tpu.dimension_semantics<arbitrary>], iteration_bounds = array<i64: 2, 3, 3>, scalar_prefetch = 0 : i64, scratch_operands = 0 : i64, tpu.core_type = #tpu.core_type<tc>, window_params = [{transform_indices = @transform_0, window_bounds = array<i64: 8, 128>}, {transform_indices = @transform_1, window_bounds = array<i64: 128, 128>}, {transform_indices = @transform_2, window_bounds = array<i64: 1, 128>}, {transform_indices = @transform_3, window_bounds = array<i64: 8, 128>}]} {
    %c0_i32 = arith.constant 0 : i32
    %0 = arith.cmpi eq, %arg2, %c0_i32 : i32
    %1 = arith.extui %0 : i1 to i32
    %c0_i32_0 = arith.constant 0 : i32
    %2 = arith.cmpi ne, %1, %c0_i32_0 : i32
    scf.if %2 {
      %c0_8 = arith.constant 0 : index
      %c0_9 = arith.constant 0 : index
      %9 = vector.load %arg5[%c0_8, %c0_9] : memref<1x128xf32, #tpu.memory_space<vmem>>, vector<1x128xf32>
      %10 = vector.shape_cast %9 : vector<1x128xf32> to vector<1x128xf32>
      %11 = vector.broadcast %10 : vector<1x128xf32> to vector<8x128xf32>
      %c0_10 = arith.constant 0 : index
      %c0_11 = arith.constant 0 : index
      %12 = vector.load %arg6[%c0_10, %c0_11] : memref<8x128xf32, #tpu.memory_space<vmem>>, vector<8x128xf32>
      tpu.vector_store %arg6[%c0_10, %c0_11], %11 {strides = array<i32>} : memref<8x128xf32, #tpu.memory_space<vmem>>, vector<8x128xf32>,
    } else {
    }
    %c0 = arith.constant 0 : index
    %c0_1 = arith.constant 0 : index
    %3 = vector.load %arg3[%c0, %c0_1] : memref<8x128xf32, #tpu.memory_space<vmem>>, vector<8x128xf32>
    %c0_2 = arith.constant 0 : index
    %c0_3 = arith.constant 0 : index
    %4 = vector.load %arg6[%c0_2, %c0_3] : memref<8x128xf32, #tpu.memory_space<vmem>>, vector<8x128xf32>
    %c0_4 = arith.constant 0 : index
    %c0_5 = arith.constant 0 : index
    %5 = vector.load %arg4[%c0_4, %c0_5] : memref<128x128xf32, #tpu.memory_space<vmem>>, vector<128x128xf32>
    %cst = arith.constant dense<0.000000e+00> : vector<8x128xf32>
    %6 = tpu.matmul %3, %5, %cst {dimension_numbers = #tpu.dot_dimension_numbers<[1], [0], [0], [1], [0, 0, 1, 1], [], []>} : vector<8x128xf32>, vector<128x128xf32>, vector<8x128xf32> -> vector<8x128xf32>
    %7 = arith.addf %4, %6 : vector<8x128xf32>
    %c0_6 = arith.constant 0 : index
    %c0_7 = arith.constant 0 : index
    %8 = vector.load %arg6[%c0_6, %c0_7] : memref<8x128xf32, #tpu.memory_space<vmem>>, vector<8x128xf32>
    tpu.vector_store %arg6[%c0_6, %c0_7], %7 {strides = array<i32>} : memref<8x128xf32, #tpu.memory_space<vmem>>, vector<8x128xf32>,
    return
  }
  func.func @transform_0(%arg0: i32, %arg1: i32, %arg2: i32) -> (i32, i32) {
    %c0_i32 = arith.constant 0 : i32
    return %arg0, %arg2 : i32, i32
  }
  func.func @transform_1(%arg0: i32, %arg1: i32, %arg2: i32) -> (i32, i32) {
    %c0_i32 = arith.constant 0 : i32
    return %arg2, %arg1 : i32, i32
  }
  func.func @transform_2(%arg0: i32, %arg1: i32, %arg2: i32) -> (i32, i32) {
    %c0_i32 = arith.constant 0 : i32
    %c0_i32_0 = arith.constant 0 : i32
    return %c0_i32, %arg1 : i32, i32
  }
  func.func @transform_3(%arg0: i32, %arg1: i32, %arg2: i32) -> (i32, i32) {
    %c0_i32 = arith.constant 0 : i32
    return %arg0, %arg1 : i32, i32
  }
}

</mosaic_0001>

<llo_original>
// kernel: tpu_custom_call.1
$region0: #{tpu_custom_call.1}
  #allocation0 [shape = 'u32[]', space=smem, size = 0x4, offset = 0x4, fixed_abs, tag = 'smem constant byte address 0x4 - core index']
  #allocation1 [shape = 'u32[72,128]{1,0:T(1,128)}', space=vmem, size = 0x9000, scoped, tag = 'internal scratch']
  %s0 = inlined_call_operand.hbm [shape: f32[16,384], index: 0, kind: input, shape index: {}]
  %s1 = inlined_call_operand.hbm [shape: f32[384,384], index: 1, kind: input, shape index: {}]
  %s2 = inlined_call_operand.hbm [shape: f32[1,384], index: 2, kind: input, shape index: {}]
  %s3 = inlined_call_operand.hbm [shape: f32[16,384], index: 3, kind: output, shape index: {}]
  %s4 = sld [smem:[#allocation0]]
  $region61: #{tpu_custom_call.1} parent=0
    _
  %s6 = ssub.s32 1, %s4
  %s7 = scalar_select 0, %s6, %s4
  $region1: #{tpu_custom_call.1} parent=0
    #allocation2 [shape = 'u8[8192]{0}', space=vmem, size = 0x2000, scoped, tag = 'input window, operand 0']
    #allocation3 [shape = 's32[2]{0}', space=sflag, size = 0x8, scoped, tag = 'scoped memory for tpu_custom_call.1']
    #allocation4 [shape = 's32[2]{0}', space=sflag, size = 0x8, scoped, tag = 'scoped memory for tpu_custom_call.1']
    #allocation5 [shape = 'u8[131072]{0}', space=vmem, size = 0x20000, scoped, tag = 'input window, operand 1']
    #allocation6 [shape = 's32[2]{0}', space=sflag, size = 0x8, scoped, tag = 'scoped memory for tpu_custom_call.1']
    #allocation7 [shape = 'u8[1024]{0}', space=vmem, size = 0x400, scoped, tag = 'input window, operand 2']
    #allocation8 [shape = 'u8[8192]{0}', space=vmem, size = 0x2000, scoped, tag = 'output window, operand 0']
    %8 = vsyncpa [#allocation3], 0
    %s9 = scalar_lea.sflag [#allocation3], 1
    %10 = vsyncpa %s9, 0
    %11 = vsyncpa [#allocation6], 0
    %s12 = scalar_lea.sflag [#allocation6], 1
    %13 = vsyncpa %s12, 0
    %14 = vsyncpa [#allocation4], 0
    %s15 = scalar_lea.sflag [#allocation4], 1
    %16 = vsyncpa %s15, 0
    loop: start=0, step=1, limit=20
    $region2: #{tpu_custom_call.1} parent=1 // loop_pre_header
      _
    $region3: #{tpu_custom_call.1} parent=1 // loop_header
      %s18 = sphi 0, %s22
      %p19 = scmp.ge.s32.totalorder %s18, 20
      %s25 = sphi 0, %s44
      %s26 = sphi 0, %s40
      %s27 = sphi 0, %s36
      %s28 = sphi 0, %s25
      %s29 = sphi 0, %s26
      %s30 = sphi 0, %s27
      %s31 = sphi 0, %s28
      %s32 = sphi 0, %s29
      %s33 = sphi 0, %s30
      %s49 = sphi 0, %s51
      %s52 = sphi 0, %s49
      %s53 = sphi 0, %s52
      %s69 = sphi 0, %s53
      %s77 = sphi 0, %s79
      %s80 = sphi 0, %s77
      %s81 = sphi 0, %s80
      %s97 = sphi 0, %s81
      %s103 = sphi 0, %s105
      %s106 = sphi 0, %s103
      %s107 = sphi 0, %s106
      %s123 = sphi 0, %s107
      %s131 = sphi 0, %s133
      %s134 = sphi 0, %s131
      %s135 = sphi 0, %s134
      %s151 = sphi 0, %s135
    $region4: #{tpu_custom_call.1} parent=1 // loop_header_branch
      %21 = sbr.rel (%p19) target = $region8
    $region5: #{tpu_custom_call.1} parent=1 // loop_body
      %s23 = ssub.s32 %s18, 1
      %s24 = ssub.s32 %s18, 2
      %s34 = sadd.s32 1, %s27
      %p35 = scmp.ge.s32.totalorder %s34, 3
      %s36 = scalar_select %p35, 0, %s34
      %s37 = sadd.s32 1, %s26
      %s38 = scalar_select %p35, %s37, %s26
      %p39 = scmp.ge.s32.totalorder %s38, 3
      %s40 = scalar_select %p39, 0, %s38
      %s41 = sadd.s32 1, %s25
      %s42 = scalar_select %p39, %s41, %s25
      %p43 = scmp.ge.s32.totalorder %s42, 2
      %s44 = scalar_select %p43, 0, %s42
      %s45 = ssub.s32 %s25, %s44
      %s46 = ssub.s32 %s27, %s36
      %s47 = sor.u32 %s45, %s46
      %p48 = scmp.eq.s32.totalorder %s47, 0
      %s50 = sadd.s32 %s49, 1
      %s51 = scalar_select %p48, %s49, %s50
      %p54 = pneg %p48
      %p55 = scmp.eq.s32.totalorder %s18, 17
      %p56 = por %p54, %p55
      %p57 = scmp.ne.s32.totalorder %s49, %s52
      %p58 = scmp.eq.s32.totalorder %s18, 0
      %p59 = por %p57, %p58
      %p60 = scmp.ne.s32.totalorder %s49, %s52
      %p61 = scmp.eq.s32.totalorder %s23, 17
      %p62 = por %p60, %p61
      %p63 = scmp.ne.s32.totalorder %s52, %s53
      %p64 = scmp.eq.s32.totalorder %s23, 0
      %p65 = por %p63, %p64
      %p66 = scmp.ne.s32.totalorder %s52, %s53
      %p67 = scmp.eq.s32.totalorder %s24, 17
      %p68 = por %p66, %p67
      %p70 = scmp.ne.s32.totalorder %s53, %s69
      %p71 = scmp.eq.s32.totalorder %s24, 0
      %p72 = por %p70, %p71
      %s73 = ssub.s32 %s27, %s36
      %s74 = ssub.s32 %s26, %s40
      %s75 = sor.u32 %s73, %s74
      %p76 = scmp.eq.s32.totalorder %s75, 0
      %s78 = sadd.s32 %s77, 1
      %s79 = scalar_select %p76, %s77, %s78
      %p82 = pneg %p76
      %p83 = scmp.eq.s32.totalorder %s18, 17
      %p84 = por %p82, %p83
      %p85 = scmp.ne.s32.totalorder %s77, %s80
      %p86 = scmp.eq.s32.totalorder %s18, 0
      %p87 = por %p85, %p86
      %p88 = scmp.ne.s32.totalorder %s77, %s80
      %p89 = scmp.eq.s32.totalorder %s23, 17
      %p90 = por %p88, %p89
      %p91 = scmp.ne.s32.totalorder %s80, %s81
      %p92 = scmp.eq.s32.totalorder %s23, 0
      %p93 = por %p91, %p92
      %p94 = scmp.ne.s32.totalorder %s80, %s81
      %p95 = scmp.eq.s32.totalorder %s24, 17
      %p96 = por %p94, %p95
      %p98 = scmp.ne.s32.totalorder %s81, %s97
      %p99 = scmp.eq.s32.totalorder %s24, 0
      %p100 = por %p98, %p99
      %s101 = ssub.s32 %s26, %s40
      %p102 = scmp.eq.s32.totalorder %s101, 0
      %s104 = sadd.s32 %s103, 1
      %s105 = scalar_select %p102, %s103, %s104
      %p108 = pneg %p102
      %p109 = scmp.eq.s32.totalorder %s18, 17
      %p110 = por %p108, %p109
      %p111 = scmp.ne.s32.totalorder %s103, %s106
      %p112 = scmp.eq.s32.totalorder %s18, 0
      %p113 = por %p111, %p112
      %p114 = scmp.ne.s32.totalorder %s103, %s106
      %p115 = scmp.eq.s32.totalorder %s23, 17
      %p116 = por %p114, %p115
      %p117 = scmp.ne.s32.totalorder %s106, %s107
      %p118 = scmp.eq.s32.totalorder %s23, 0
      %p119 = por %p117, %p118
      %p120 = scmp.ne.s32.totalorder %s106, %s107
      %p121 = scmp.eq.s32.totalorder %s24, 17
      %p122 = por %p120, %p121
      %p124 = scmp.ne.s32.totalorder %s107, %s123
      %p125 = scmp.eq.s32.totalorder %s24, 0
      %p126 = por %p124, %p125
      %s127 = ssub.s32 %s25, %s44
      %s128 = ssub.s32 %s26, %s40
      %s129 = sor.u32 %s127, %s128
      %p130 = scmp.eq.s32.totalorder %s129, 0
      %s132 = sadd.s32 %s131, 1
      %s133 = scalar_select %p130, %s131, %s132
      %p136 = pneg %p130
      %p137 = scmp.eq.s32.totalorder %s18, 17
      %p138 = por %p136, %p137
      %p139 = scmp.ne.s32.totalorder %s131, %s134
      %p140 = scmp.eq.s32.totalorder %s18, 0
      %p141 = por %p139, %p140
      %p142 = scmp.ne.s32.totalorder %s131, %s134
      %p143 = scmp.eq.s32.totalorder %s23, 17
      %p144 = por %p142, %p143
      %p145 = scmp.ne.s32.totalorder %s134, %s135
      %p146 = scmp.eq.s32.totalorder %s23, 0
      %p147 = por %p145, %p146
      %p148 = scmp.ne.s32.totalorder %s134, %s135
      %p149 = scmp.eq.s32.totalorder %s24, 17
      %p150 = por %p148, %p149
      %p152 = scmp.ne.s32.totalorder %s135, %s151
      %p153 = scmp.eq.s32.totalorder %s24, 0
      %p154 = por %p152, %p153
      %p155 = scmp.le.s32.totalorder 1, %s18
      %p156 = scmp.lt.s32.totalorder %s18, 19
      %p157 = pnand %p155, %p156
      %p158 = pneg %p157
      // Predicated region
      $region9: #{tpu_custom_call.1} parent=5 // pred_check
        _
      $region10: #{tpu_custom_call.1} parent=5 // pred_check_branch
        %160 = sbr.rel (%p157) target = $region12
      $region11: #{tpu_custom_call.1} parent=5 // pred_region
        %s161 = ssub.s32 %s18, 1
      $region12: #{tpu_custom_call.1} parent=5 // pred_fallthru
        _
      %p162 = scmp.lt.s32.totalorder %s18, 18
      // Predicated region
      $region13: #{tpu_custom_call.1} parent=5 // pred_check
        %p163 = pneg %p162
      $region14: #{tpu_custom_call.1} parent=5 // pred_check_branch
        %165 = sbr.rel (%p163) target = $region16
      $region15: #{tpu_custom_call.1} parent=5 // pred_region
        // Predicated region
        $region17: #{tpu_custom_call.1} parent=15 // pred_check
          %p166 = pneg %p59
        $region18: #{tpu_custom_call.1} parent=15 // pred_check_branch
          %168 = sbr.rel (%p166) target = $region20
        $region19: #{tpu_custom_call.1} parent=15 // pred_region
          %s169 = sand.u32 %s49, 1
          %s170 = scalar_lea.sflag [#allocation3], %s169
          %s171 = sand.u32 %s49, 1
          %s172 = smul.addr %s171, 8
          %s173 = scalar_lea.vmem [#allocation2], %s172
          %175 = vsyncadd %s170, 0
          %s176 = smul.addr %s25, 3
          %s177 = sadd.s32 %s27, %s176
          %s178 = smul.addr %s177, 8
          %s179 = scalar_lea.hbm %s0, %s178
          %s181 = sshll.u32 %s179, 4
          %s182 = int_to_ptr.hbm [resolvable:$true] %s181
          %s183 = sshll.u32 %s173, 4
          %s184 = int_to_ptr.vmem [resolvable:$true] %s183
          %186 = dma.hbm_to_vmem [thread:$0]  %s182, 128, %s184, %s170
        $region20: #{tpu_custom_call.1} parent=15 // pred_fallthru
          _
        // Predicated region
        $region21: #{tpu_custom_call.1} parent=15 // pred_check
          %p187 = pneg %p87
        $region22: #{tpu_custom_call.1} parent=15 // pred_check_branch
          %189 = sbr.rel (%p187) target = $region24
        $region23: #{tpu_custom_call.1} parent=15 // pred_region
          %s190 = sand.u32 %s18, 1
          %s191 = scalar_lea.sflag [#allocation6], %s190
          %s192 = sand.u32 %s77, 1
          %s193 = smul.addr %s192, 128
          %s194 = scalar_lea.vmem [#allocation5], %s193
          %s195 = smul.u32 16, %s27
          %197 = vsyncadd %s191, 0
          %s198 = smul.addr %s195, 3
          %s199 = sadd.s32 %s26, %s198
          %s200 = smul.addr %s199, 8
          %s201 = scalar_lea.hbm %s1, %s200
          %s202 = sshll.u32 %s201, 4
          %s203 = int_to_ptr.hbm [resolvable:$true] %s202
          %s204 = sshll.u32 %s194, 4
          %s205 = int_to_ptr.vmem [resolvable:$true] %s204
          %210 = dma.hbm_to_vmem [thread:$0]  %s203, 2048, %s205, %s191, 384, 128, 8
        $region24: #{tpu_custom_call.1} parent=15 // pred_fallthru
          _
        // Predicated region
        $region25: #{tpu_custom_call.1} parent=15 // pred_check
          %p211 = pneg %p113
        $region26: #{tpu_custom_call.1} parent=15 // pred_check_branch
          %213 = sbr.rel (%p211) target = $region28
        $region27: #{tpu_custom_call.1} parent=15 // pred_region
          %s214 = sand.u32 %s18, 1
          %s215 = scalar_lea.sflag [#allocation6], %s214
          %s216 = sand.u32 %s103, 1
          %s217 = scalar_lea.vmem [#allocation7], %s216
          %219 = vsyncadd %s215, 0
          %s220 = scalar_lea.hbm %s2, %s26
          %s222 = sshll.u32 %s220, 4
          %s223 = int_to_ptr.hbm [resolvable:$true] %s222
          %s224 = sshll.u32 %s217, 4
          %s225 = int_to_ptr.vmem [resolvable:$true] %s224
          %227 = dma.hbm_to_vmem [thread:$0]  %s223, 16, %s225, %s215
        $region28: #{tpu_custom_call.1} parent=15 // pred_fallthru
          _
      $region16: #{tpu_custom_call.1} parent=5 // pred_fallthru
        _
      %p228 = scmp.le.s32.totalorder 1, %s18
      %p229 = scmp.lt.s32.totalorder %s18, 19
      %p230 = pnand %p228, %p229
      %p231 = pneg %p230
      // Predicated region
      $region29: #{tpu_custom_call.1} parent=5 // pred_check
        _
      $region30: #{tpu_custom_call.1} parent=5 // pred_check_branch
        %233 = sbr.rel (%p230) target = $region32
      $region31: #{tpu_custom_call.1} parent=5 // pred_region
        %s234 = ssub.s32 %s18, 1
        %s235 = sand.u32 %s52, 1
        %s236 = scalar_lea.sflag [#allocation3], %s235
        %s237 = sand.u32 %s52, 1
        %s238 = smul.addr %s237, 8
        %s239 = scalar_lea.vmem [#allocation2], %s238
        // Predicated region
        $region33: #{tpu_custom_call.1} parent=31 // pred_check
          %p240 = pneg %p65
        $region34: #{tpu_custom_call.1} parent=31 // pred_check_branch
          %242 = sbr.rel (%p240) target = $region36
        $region35: #{tpu_custom_call.1} parent=31 // pred_region
          %244 = dma.done %s236, 128
        $region36: #{tpu_custom_call.1} parent=31 // pred_fallthru
          _
        %s245 = sand.u32 %s23, 1
        %s246 = scalar_lea.sflag [#allocation6], %s245
        %s247 = sand.u32 %s80, 1
        %s248 = smul.addr %s247, 128
        %s249 = scalar_lea.vmem [#allocation5], %s248
        // Predicated region
        $region37: #{tpu_custom_call.1} parent=31 // pred_check
          %p250 = pneg %p93
        $region38: #{tpu_custom_call.1} parent=31 // pred_check_branch
          %252 = sbr.rel (%p250) target = $region40
        $region39: #{tpu_custom_call.1} parent=31 // pred_region
          %254 = dma.done %s246, 2048
        $region40: #{tpu_custom_call.1} parent=31 // pred_fallthru
          _
        %s255 = sand.u32 %s23, 1
        %s256 = scalar_lea.sflag [#allocation6], %s255
        %s257 = sand.u32 %s106, 1
        %s258 = scalar_lea.vmem [#allocation7], %s257
        // Predicated region
        $region41: #{tpu_custom_call.1} parent=31 // pred_check
          %p259 = pneg %p119
        $region42: #{tpu_custom_call.1} parent=31 // pred_check_branch
          %261 = sbr.rel (%p259) target = $region44
        $region43: #{tpu_custom_call.1} parent=31 // pred_region
          %263 = dma.done %s256, 16
        $region44: #{tpu_custom_call.1} parent=31 // pred_fallthru
          _
        %s264 = sand.u32 %s52, 1
        %s265 = scalar_lea.sflag [#allocation3], %s264
        %s266 = sand.u32 %s52, 1
        %s267 = smul.addr %s266, 8
        %s268 = scalar_lea.vmem [#allocation2], %s267
        %p269 = pneg %p65
        %p270 = pneg %p62
        %s271 = sand.u32 %s23, 1
        %s272 = scalar_lea.sflag [#allocation6], %s271
        %s273 = sand.u32 %s80, 1
        %s274 = smul.addr %s273, 128
        %s275 = scalar_lea.vmem [#allocation5], %s274
        %p276 = pneg %p93
        %p277 = pneg %p90
        %s278 = sand.u32 %s23, 1
        %s279 = scalar_lea.sflag [#allocation6], %s278
        %s280 = sand.u32 %s106, 1
        %s281 = scalar_lea.vmem [#allocation7], %s280
        %p282 = pneg %p119
        %p283 = pneg %p116
        %p284 = pneg %p147
        %p285 = pneg %p144
        %s286 = sand.u32 %s134, 1
        %s287 = scalar_lea.sflag [#allocation4], %s286
        %s288 = sand.u32 %s134, 1
        %s289 = smul.addr %s288, 8
        %s290 = scalar_lea.vmem [#allocation8], %s289
        %s291 = smul.u32 16, %s30
        %p292 = scmp.eq.s32.totalorder %s30, 0
        // Predicated region
        $region45: #{tpu_custom_call.1} parent=31 // pred_check
          %p293 = pneg %p292
        $region46: #{tpu_custom_call.1} parent=31 // pred_check_branch
          %295 = sbr.rel (%p293) target = $region48
        $region47: #{tpu_custom_call.1} parent=31 // pred_region
          %v296 = vld [vmem:[%s258] sm:$0x1]
          %v298 = vperm.slane %v296, 0
          %300 = vst [vmem:[%s290] sm:$0xff] %v298
        $region48: #{tpu_custom_call.1} parent=31 // pred_fallthru
          _
        %v301 = vld [vmem:[%s239] sm:$0xff]
        %v302 = vld [vmem:[%s290] sm:$0xff]
        %v303 = vld [vmem:[%s249] sm:$0xff]
        %v304 = vld [vmem:[%s249 + $0x8] sm:$0xff]
        %v305 = vld [vmem:[%s249 + $0x10] sm:$0xff]
        %v306 = vld [vmem:[%s249 + $0x18] sm:$0xff]
        %v307 = vld [vmem:[%s249 + $0x20] sm:$0xff]
        %v308 = vld [vmem:[%s249 + $0x28] sm:$0xff]
        %v309 = vld [vmem:[%s249 + $0x30] sm:$0xff]
        %v310 = vld [vmem:[%s249 + $0x38] sm:$0xff]
        %v311 = vld [vmem:[%s249 + $0x40] sm:$0xff]
        %v312 = vld [vmem:[%s249 + $0x48] sm:$0xff]
        %v313 = vld [vmem:[%s249 + $0x50] sm:$0xff]
        %v314 = vld [vmem:[%s249 + $0x58] sm:$0xff]
        %v315 = vld [vmem:[%s249 + $0x60] sm:$0xff]
        %v316 = vld [vmem:[%s249 + $0x68] sm:$0xff]
        %v317 = vld [vmem:[%s249 + $0x70] sm:$0xff]
        %v318 = vld [vmem:[%s249 + $0x78] sm:$0xff]
        %319 = vmatpush.msra.mxu0 %v318
        %320 = vmatpush.msra.mxu0 %v317
        %321 = vmatpush.msra.mxu0 %v316
        %322 = vmatpush.msra.mxu0 %v315
        %323 = vmatpush.msra.mxu0 %v314
        %324 = vmatpush.msra.mxu0 %v313
        %325 = vmatpush.msra.mxu0 %v312
        %326 = vmatpush.msra.mxu0 %v311
        %327 = vmatpush.msra.mxu0 %v310
        %328 = vmatpush.msra.mxu0 %v309
        %329 = vmatpush.msra.mxu0 %v308
        %330 = vmatpush.msra.mxu0 %v307
        %331 = vmatpush.msra.mxu0 %v306
        %332 = vmatpush.msra.mxu0 %v305
        %333 = vmatpush.msra.mxu0 %v304
        %334 = vmatpush.msra.mxu0 %v303
        %335 = vmatmul.f32.gmra.mxu0 %v301
        %v336 = vpop.f32.mrf.mxu0
        %v337 = vadd.f32 0.0, %v336
        %338 = vdwg.mxu0
        %v339 = vadd.f32 %v302, %v337
        %340 = vst [vmem:[%s290] sm:$0xff] %v339
        %s341 = sand.u32 %s134, 1
        %s342 = scalar_lea.sflag [#allocation4], %s341
        %s343 = sand.u32 %s134, 1
        %s344 = smul.addr %s343, 8
        %s345 = scalar_lea.vmem [#allocation8], %s344
        // Predicated region
        $region49: #{tpu_custom_call.1} parent=31 // pred_check
          %p346 = pneg %p144
        $region50: #{tpu_custom_call.1} parent=31 // pred_check_branch
          %348 = sbr.rel (%p346) target = $region52
        $region51: #{tpu_custom_call.1} parent=31 // pred_region
          %350 = vsyncadd %s342, 0
          %s351 = smul.addr %s28, 3
          %s352 = sadd.s32 %s29, %s351
          %s353 = smul.addr %s352, 8
          %s354 = scalar_lea.hbm %s3, %s353
          %s356 = sshll.u32 %s345, 4
          %s357 = int_to_ptr.vmem [resolvable:$true] %s356
          %s358 = sshll.u32 %s354, 4
          %s359 = int_to_ptr.hbm [resolvable:$true] %s358
          %361 = dma.vmem_to_hbm [thread:$0]  %s357, 128, %s359, %s342
        $region52: #{tpu_custom_call.1} parent=31 // pred_fallthru
          _
      $region32: #{tpu_custom_call.1} parent=5 // pred_fallthru
        _
      %p362 = scmp.le.s32.totalorder 2, %s18
      // Predicated region
      $region53: #{tpu_custom_call.1} parent=5 // pred_check
        %p363 = pneg %p362
      $region54: #{tpu_custom_call.1} parent=5 // pred_check_branch
        %365 = sbr.rel (%p363) target = $region56
      $region55: #{tpu_custom_call.1} parent=5 // pred_region
        %s366 = ssub.s32 %s18, 2
        // Predicated region
        $region57: #{tpu_custom_call.1} parent=55 // pred_check
          %p367 = pneg %p150
        $region58: #{tpu_custom_call.1} parent=55 // pred_check_branch
          %369 = sbr.rel (%p367) target = $region60
        $region59: #{tpu_custom_call.1} parent=55 // pred_region
          %s370 = sand.u32 %s135, 1
          %s371 = scalar_lea.sflag [#allocation4], %s370
          %s372 = sand.u32 %s135, 1
          %s373 = smul.addr %s372, 8
          %s374 = scalar_lea.vmem [#allocation8], %s373
          %376 = dma.done %s371, 128
        $region60: #{tpu_custom_call.1} parent=55 // pred_fallthru
          _
      $region56: #{tpu_custom_call.1} parent=5 // pred_fallthru
        _
    $region6: #{tpu_custom_call.1} parent=1 // loop_footer
      %s22 = sadd.s32 1, %s18
    $region7: #{tpu_custom_call.1} parent=1 // loop_footer_branch
      %17 = sbr.rel target = $region3
    $region8: #{tpu_custom_call.1} parent=1 // loop_exit
      _
    %377 = vsyncpa [#allocation3], 1
    %s378 = scalar_lea.sflag [#allocation3], 1
    %379 = vsyncpa %s378, 1
    %380 = vsyncpa [#allocation6], 1
    %s381 = scalar_lea.sflag [#allocation6], 1
    %382 = vsyncpa %s381, 1
    %383 = vsyncpa [#allocation4], 1
    %s384 = scalar_lea.sflag [#allocation4], 1
    %385 = vsyncpa %s384, 1

</llo_original>
